<compile_context>
chip_gen: v5e
topology: v5e:2x2
jax: 0.10.0
libtpu: 0.0.40
codegen_flags: <defaults>
</compile_context>

<pallas_src>
import jax
import jax.numpy as jnp
from jax.experimental import pallas as pl
from jax.experimental.pallas import tpu as pltpu


_H1, _H2 = 512, 256
_LANE = 128
_NEG_INF = -1e30


def _round_up(x, m):
    return ((x + m - 1) // m) * m


def _is_v6_or_newer():
    """True on v6e / v7x (bf16 VPU path + 32 MiB default scoped VMEM)."""
    try:
        kind = jax.devices()[0].device_kind.lower()
    except Exception:
        return True
    return ("v6" in kind) or ("v7" in kind)


def _choose_batch_tile(B, block_b, min_steps=2):
    """Batch tile (multiple of 8) that fits block_b, gives >= min_steps grid
    steps when the batch is big enough (v7x dual-TC occupancy), and keeps the
    last-tile padding small."""
    B8 = _round_up(max(B, 1), 8)
    if B8 <= 8 * min_steps:
        return min(B8, block_b)
    k = max(min_steps, -(-B8 // block_b))     # smallest step count with TB <= block_b
    return _round_up(-(-B8 // k), 8)


# ----------------------------------------------------------------------------
# Pallas kernel: fused 3-layer MLP (one batch tile per grid step)
# ----------------------------------------------------------------------------
def _categorical_net_kernel(x_ref, w1_ref, b1_ref, w2_ref, b2_ref, w3_ref, b3_ref,
                            logits_ref):
    # Epilogue dtype (bf16 on v6e/v7x, f32 on v5e) is carried by the bias refs.
    ep_dt = b1_ref.dtype

    # fc1 + ReLU   (dropout == identity in eval mode)
    x = x_ref[...].astype(jnp.bfloat16)
    h1 = jnp.dot(x, w1_ref[...], preferred_element_type=jnp.float32)
    h1 = jnp.maximum(h1.astype(ep_dt) + b1_ref[...], 0).astype(jnp.bfloat16)

    # fc2 + ReLU
    h2 = jnp.dot(h1, w2_ref[...], preferred_element_type=jnp.float32)
    h2 = jnp.maximum(h2.astype(ep_dt) + b2_ref[...], 0).astype(jnp.bfloat16)

    # fc3 -> logits (head padded to a full 128-lane block -> unmasked stores)
    logits = jnp.dot(h2, w3_ref[...], preferred_element_type=jnp.float32) + b3_ref[...]
    logits_ref[...] = logits


def categorical_net_forward_padded(x, params, *, block_b=None):
    """Runs the fused MLP kernel. Returns lane-padded logits [B, 128*ceil(A/128)]
    in f32; padded columns carry a -1e30 bias (never sampled, log_softmax-safe)."""
    w1, b1, w2, b2, w3, b3 = params
    B, num_inputs = x.shape
    A = w3.shape[1]
    A_pad = _round_up(A, _LANE)

    newer = _is_v6_or_newer()
    if block_b is None:
        # v5e default scoped VMEM is 16 MiB -> cap the tile there; v6e/v7x get 32 MiB.
        block_b = 2048 if newer else 1024
    ep_dt = jnp.bfloat16 if newer else jnp.float32

    # bf16 weights at the MXU inputs.
    w1b = w1.astype(jnp.bfloat16)
    w2b = w2.astype(jnp.bfloat16)
    # Pad fc3 to 128 output lanes: zero weight columns + huge-negative bias so the
    # padded lanes behave like -inf under softmax/sampling.
    w3p = jnp.zeros((w3.shape[0], A_pad), jnp.bfloat16).at[:, :A].set(w3.astype(jnp.bfloat16))
    b3p = jnp.full((1, A_pad), _NEG_INF, jnp.float32).at[:, :A].set(
        b3.reshape(1, A).astype(jnp.float32))
    # Hidden-layer biases in the epilogue dtype (bf16 on v6e/v7x, f32 on v5e).
    b1r = b1.reshape(1, _H1).astype(ep_dt)
    b2r = b2.reshape(1, _H2).astype(ep_dt)

    TB = _choose_batch_tile(B, block_b)
    B_pad = _round_up(B, TB)
    if B_pad != B:
        x = jnp.pad(x, ((0, B_pad - B), (0, 0)))

    resident = lambda shape: pl.BlockSpec(shape, lambda i: (0, 0))

    logits_pad = pl.pallas_call(
        _categorical_net_kernel,
        out_shape=jax.ShapeDtypeStruct((B_pad, A_pad), jnp.float32),
        grid=(B_pad // TB,),
        in_specs=[
            pl.BlockSpec((TB, num_inputs), lambda i: (i, 0)),  # x tile (pipelined)
            resident((num_inputs, _H1)),                       # w1 (VMEM-resident)
            resident((1, _H1)),                                # b1
            resident((_H1, _H2)),                              # w2
            resident((1, _H2)),                                # b2
            resident((_H2, A_pad)),                            # w3 (padded)
            resident((1, A_pad)),                              # b3 (padded)
        ],
        out_specs=pl.BlockSpec((TB, A_pad), lambda i: (i, 0)),
        compiler_params=pltpu.CompilerParams(
            dimension_semantics=("parallel",),
        ),
    )(x, w1b, b1r, w2b, b2r, w3p, b3p)

    return logits_pad[:B]   # keep row slice only; columns stay padded


def categorical_net_forward(x, params, *, block_b=None):
    """Module-equivalent logits [B, num_outputs]."""
    A = params[5].shape[0]
    return categorical_net_forward_padded(x, params, block_b=block_b)[:, :A]


# ----------------------------------------------------------------------------
# Minimal JAX-side analogue of CustomFixedCategorical
# ----------------------------------------------------------------------------
class CustomFixedCategoricalJax:
    """Holds (possibly lane-padded) logits; sample / log_probs mimic torch.
    Padded lanes carry -1e30 bias, so they are never sampled and contribute
    ~0 probability to log_softmax."""

    def __init__(self, logits, num_outputs=None):
        self.raw_logits = logits
        self.num_outputs = logits.shape[-1] if num_outputs is None else num_outputs
        self.logits = jax.nn.log_softmax(logits, axis=-1)

    def sample(self, key):
        return jax.random.categorical(key, self.raw_logits, axis=-1)

    def log_probs(self, actions):
        a = actions.squeeze(-1)
        lp = jnp.take_along_axis(self.logits, a[:, None], axis=-1)  # [B, 1]
        return lp.reshape(actions.shape[0], -1).sum(-1)[:, None]


def categorical_net_apply(x, params):
    """Matches CategoricalNet.forward: returns (distribution, logits[B, A])."""
    A = params[5].shape[0]
    padded = categorical_net_forward_padded(x, params)
    return CustomFixedCategoricalJax(padded, num_outputs=A), padded[:, :A]


# ----------------------------------------------------------------------------
# Deterministic parameter init (same shapes as the PyTorch module, W transposed)
# ----------------------------------------------------------------------------
def init_params(key, num_inputs, num_outputs):
    def linear(key, fan_in, fan_out):
        kw, kb = jax.random.split(key)
        bound = 1.0 / jnp.sqrt(fan_in)
        w = jax.random.uniform(kw, (fan_in, fan_out), jnp.float32, -bound, bound)
        b = jax.random.uniform(kb, (fan_out,), jnp.float32, -bound, bound)
        return w, b

    k1, k2, k3 = jax.random.split(key, 3)
    w1, b1 = linear(k1, num_inputs, _H1)
    w2, b2 = linear(k2, _H1, _H2)
    w3, b3 = linear(k3, _H2, num_outputs)
    return (w1, b1, w2, b2, w3, b3)


def _ref_forward_matched(x, params, ep_dt):
    """Plain-JAX reference with the same bf16-at-MXU / epilogue precision."""
    w1, b1, w2, b2, w3, b3 = params
    h1 = jnp.dot(x.astype(jnp.bfloat16), w1.astype(jnp.bfloat16),
                 preferred_element_type=jnp.float32)
    h1 = jnp.maximum(h1.astype(ep_dt) + b1.astype(ep_dt), 0).astype(jnp.bfloat16)
    h2 = jnp.dot(h1, w2.astype(jnp.bfloat16), preferred_element_type=jnp.float32)
    h2 = jnp.maximum(h2.astype(ep_dt) + b2.astype(ep_dt), 0).astype(jnp.bfloat16)
    return jnp.dot(h2, w3.astype(jnp.bfloat16),
                   preferred_element_type=jnp.float32) + b3


def _ref_forward_f32(x, params):
    """Full-precision reference (== the PyTorch eval-mode forward)."""
    w1, b1, w2, b2, w3, b3 = params
    h1 = jnp.maximum(jnp.dot(x, w1) + b1, 0.0)
    h2 = jnp.maximum(jnp.dot(h1, w2) + b2, 0.0)
    return jnp.dot(h2, w3) + b3


if __name__ == "__main__":
    key = jax.random.PRNGKey(0)
    k_x, k_p, k_s = jax.random.split(key, 3)

    # Small shapes; B=24 exercises a 2-step grid + row padding (TB=16, B_pad=32).
    B, NUM_INPUTS, NUM_OUTPUTS = 24, 32, 16
    x = jax.random.normal(k_x, (B, NUM_INPUTS), jnp.float32)
    params = init_params(k_p, NUM_INPUTS, NUM_OUTPUTS)

    logits = jax.jit(categorical_net_forward)(x, params)
    jax.block_until_ready(logits)

    dist, logits_api = categorical_net_apply(x, params)
    actions = dist.sample(k_s)[:, None]
    lp = dist.log_probs(actions)

    ep_dt = jnp.bfloat16 if _is_v6_or_newer() else jnp.float32
    ref_matched = _ref_forward_matched(x, params, ep_dt)
    ref_f32 = _ref_forward_f32(x, params)
    ref_logprobs = jax.nn.log_softmax(ref_f32, axis=-1)

    assert logits.shape == (B, NUM_OUTPUTS)
    assert logits_api.shape == (B, NUM_OUTPUTS)
    # Same-precision reference: tight check of the kernel plumbing.
    assert jnp.allclose(logits, ref_matched, atol=2e-2, rtol=2e-2)
    # Full-f32 reference: bounds the deviation from the original torch module.
    assert jnp.allclose(logits, ref_f32, atol=1e-1, rtol=1e-1)
    # Distribution built from padded logits must match unpadded log-softmax.
    assert jnp.allclose(dist.logits[:, :NUM_OUTPUTS], ref_logprobs, atol=1e-1, rtol=1e-1)
    assert actions.shape == (B, 1) and lp.shape == (B, 1)
    assert bool(jnp.all(actions[:, 0] < NUM_OUTPUTS))       # padded lanes never sampled
    assert bool(jnp.all(jnp.isfinite(lp)))

    print("KERNEL_OK")
</pallas_src>

<mosaic_0001>
module attributes {stable_mosaic.version = 11 : i64} {
  func.func @_categorical_net_kernel(%arg0: i32, %arg1: memref<16x32xf32, #tpu.memory_space<vmem>>, %arg2: memref<32x512xbf16, #tpu.memory_space<vmem>>, %arg3: memref<1x512xf32, #tpu.memory_space<vmem>>, %arg4: memref<512x256xbf16, #tpu.memory_space<vmem>>, %arg5: memref<1x256xf32, #tpu.memory_space<vmem>>, %arg6: memref<256x128xbf16, #tpu.memory_space<vmem>>, %arg7: memref<1x128xf32, #tpu.memory_space<vmem>>, %arg8: memref<16x128xf32, #tpu.memory_space<vmem>>) attributes {dimension_semantics = [#tpu.dimension_semantics<parallel>], iteration_bounds = array<i64: 2>, scalar_prefetch = 0 : i64, scratch_operands = 0 : i64, tpu.core_type = #tpu.core_type<tc>, window_params = [{transform_indices = @transform_0, window_bounds = array<i64: 16, 32>}, {pipeline_mode = #tpu.pipeline_mode<synchronous>, transform_indices = @transform_1, window_bounds = array<i64: 32, 512>}, {pipeline_mode = #tpu.pipeline_mode<synchronous>, transform_indices = @transform_2, window_bounds = array<i64: 1, 512>}, {pipeline_mode = #tpu.pipeline_mode<synchronous>, transform_indices = @transform_3, window_bounds = array<i64: 512, 256>}, {pipeline_mode = #tpu.pipeline_mode<synchronous>, transform_indices = @transform_4, window_bounds = array<i64: 1, 256>}, {pipeline_mode = #tpu.pipeline_mode<synchronous>, transform_indices = @transform_5, window_bounds = array<i64: 256, 128>}, {pipeline_mode = #tpu.pipeline_mode<synchronous>, transform_indices = @transform_6, window_bounds = array<i64: 1, 128>}, {transform_indices = @transform_7, window_bounds = array<i64: 16, 128>}]} {
    %c0 = arith.constant 0 : index
    %c0_0 = arith.constant 0 : index
    %0 = vector.load %arg1[%c0, %c0_0] : memref<16x32xf32, #tpu.memory_space<vmem>>, vector<16x32xf32>
    %1 = arith.truncf %0 : vector<16x32xf32> to vector<16x32xbf16>
    %c0_1 = arith.constant 0 : index
    %c0_2 = arith.constant 0 : index
    %2 = vector.load %arg2[%c0_1, %c0_2] : memref<32x512xbf16, #tpu.memory_space<vmem>>, vector<32x512xbf16>
    %cst = arith.constant dense<0.000000e+00> : vector<16x512xf32>
    %3 = tpu.matmul %1, %2, %cst {dimension_numbers = #tpu.dot_dimension_numbers<[1], [0], [0], [1], [0, 0, 1, 1], [], []>} : vector<16x32xbf16>, vector<32x512xbf16>, vector<16x512xf32> -> vector<16x512xf32>
    %c0_3 = arith.constant 0 : index
    %c0_4 = arith.constant 0 : index
    %4 = vector.load %arg3[%c0_3, %c0_4] : memref<1x512xf32, #tpu.memory_space<vmem>>, vector<1x512xf32>
    %5 = vector.broadcast %4 : vector<1x512xf32> to vector<16x512xf32>
    %6 = arith.addf %3, %5 : vector<16x512xf32>
    %cst_5 = arith.constant 0.000000e+00 : f32
    %7 = vector.broadcast %cst_5 : f32 to vector<16x512xf32>
    %8 = arith.maximumf %6, %7 : vector<16x512xf32>
    %9 = arith.truncf %8 : vector<16x512xf32> to vector<16x512xbf16>
    %c0_6 = arith.constant 0 : index
    %c0_7 = arith.constant 0 : index
    %10 = vector.load %arg4[%c0_6, %c0_7] : memref<512x256xbf16, #tpu.memory_space<vmem>>, vector<512x256xbf16>
    %cst_8 = arith.constant dense<0.000000e+00> : vector<16x256xf32>
    %11 = tpu.matmul %9, %10, %cst_8 {dimension_numbers = #tpu.dot_dimension_numbers<[1], [0], [0], [1], [0, 0, 1, 1], [], []>} : vector<16x512xbf16>, vector<512x256xbf16>, vector<16x256xf32> -> vector<16x256xf32>
    %c0_9 = arith.constant 0 : index
    %c0_10 = arith.constant 0 : index
    %12 = vector.load %arg5[%c0_9, %c0_10] : memref<1x256xf32, #tpu.memory_space<vmem>>, vector<1x256xf32>
    %13 = vector.broadcast %12 : vector<1x256xf32> to vector<16x256xf32>
    %14 = arith.addf %11, %13 : vector<16x256xf32>
    %cst_11 = arith.constant 0.000000e+00 : f32
    %15 = vector.broadcast %cst_11 : f32 to vector<16x256xf32>
    %16 = arith.maximumf %14, %15 : vector<16x256xf32>
    %17 = arith.truncf %16 : vector<16x256xf32> to vector<16x256xbf16>
    %c0_12 = arith.constant 0 : index
    %c0_13 = arith.constant 0 : index
    %18 = vector.load %arg6[%c0_12, %c0_13] : memref<256x128xbf16, #tpu.memory_space<vmem>>, vector<256x128xbf16>
    %cst_14 = arith.constant dense<0.000000e+00> : vector<16x128xf32>
    %19 = tpu.matmul %17, %18, %cst_14 {dimension_numbers = #tpu.dot_dimension_numbers<[1], [0], [0], [1], [0, 0, 1, 1], [], []>} : vector<16x256xbf16>, vector<256x128xbf16>, vector<16x128xf32> -> vector<16x128xf32>
    %c0_15 = arith.constant 0 : index
    %c0_16 = arith.constant 0 : index
    %20 = vector.load %arg7[%c0_15, %c0_16] : memref<1x128xf32, #tpu.memory_space<vmem>>, vector<1x128xf32>
    %21 = vector.broadcast %20 : vector<1x128xf32> to vector<16x128xf32>
    %22 = arith.addf %19, %21 : vector<16x128xf32>
    %c0_17 = arith.constant 0 : index
    %c0_18 = arith.constant 0 : index
    %23 = vector.load %arg8[%c0_17, %c0_18] : memref<16x128xf32, #tpu.memory_space<vmem>>, vector<16x128xf32>
    tpu.vector_store %arg8[%c0_17, %c0_18], %22 {strides = array<i32>} : memref<16x128xf32, #tpu.memory_space<vmem>>, vector<16x128xf32>,
    return
  }
  func.func @transform_0(%arg0: i32) -> (i32, i32) {
    %c0_i32 = arith.constant 0 : i32
    %c0_i32_0 = arith.constant 0 : i32
    return %arg0, %c0_i32 : i32, i32
  }
  func.func @transform_1(%arg0: i32) -> (i32, i32) {
    %c0_i32 = arith.constant 0 : i32
    %c0_i32_0 = arith.constant 0 : i32
    %c0_i32_1 = arith.constant 0 : i32
    return %c0_i32, %c0_i32_0 : i32, i32
  }
  func.func @transform_2(%arg0: i32) -> (i32, i32) {
    %c0_i32 = arith.constant 0 : i32
    %c0_i32_0 = arith.constant 0 : i32
    %c0_i32_1 = arith.constant 0 : i32
    return %c0_i32, %c0_i32_0 : i32, i32
  }
  func.func @transform_3(%arg0: i32) -> (i32, i32) {
    %c0_i32 = arith.constant 0 : i32
    %c0_i32_0 = arith.constant 0 : i32
    %c0_i32_1 = arith.constant 0 : i32
    return %c0_i32, %c0_i32_0 : i32, i32
  }
  func.func @transform_4(%arg0: i32) -> (i32, i32) {
    %c0_i32 = arith.constant 0 : i32
    %c0_i32_0 = arith.constant 0 : i32
    %c0_i32_1 = arith.constant 0 : i32
    return %c0_i32, %c0_i32_0 : i32, i32
  }
  func.func @transform_5(%arg0: i32) -> (i32, i32) {
    %c0_i32 = arith.constant 0 : i32
    %c0_i32_0 = arith.constant 0 : i32
    %c0_i32_1 = arith.constant 0 : i32
    return %c0_i32, %c0_i32_0 : i32, i32
  }
  func.func @transform_6(%arg0: i32) -> (i32, i32) {
    %c0_i32 = arith.constant 0 : i32
    %c0_i32_0 = arith.constant 0 : i32
    %c0_i32_1 = arith.constant 0 : i32
    return %c0_i32, %c0_i32_0 : i32, i32
  }
  func.func @transform_7(%arg0: i32) -> (i32, i32) {
    %c0_i32 = arith.constant 0 : i32
    %c0_i32_0 = arith.constant 0 : i32
    return %arg0, %c0_i32 : i32, i32
  }
}

</mosaic_0001>

<llo_original>
// kernel: categorical_net_forward.1
$region0: #{categorical_net_forward.1}
  #allocation0 [shape = 'u32[]', space=smem, size = 0x4, offset = 0x4, fixed_abs, tag = 'smem constant byte address 0x4 - core index']
  #allocation1 [shape = 'u32[72,128]{1,0:T(1,128)}', space=vmem, size = 0x9000, scoped, tag = 'internal scratch']
  %s0 = inlined_call_operand.vmem [shape: f32[32,32], index: 0, kind: input, shape index: {}]
  %s1 = inlined_call_operand.vmem [shape: bf16[32,512], index: 1, kind: input, shape index: {}]
  %s2 = inlined_call_operand.vmem [shape: f32[1,512], index: 2, kind: input, shape index: {}]
  %s3 = inlined_call_operand.vmem [shape: bf16[512,256], index: 3, kind: input, shape index: {}]
  %s4 = inlined_call_operand.vmem [shape: f32[1,256], index: 4, kind: input, shape index: {}]
  %s5 = inlined_call_operand.vmem [shape: bf16[256,128], index: 5, kind: input, shape index: {}]
  %s6 = inlined_call_operand.vmem [shape: f32[1,128], index: 6, kind: input, shape index: {}]
  %s7 = inlined_call_operand.vmem [shape: f32[32,128], index: 7, kind: output, shape index: {}]
  %s8 = sld [smem:[#allocation0]]
  $region61: #{categorical_net_forward.1} parent=0
    _
  %s10 = ssub.s32 1, %s8
  %s11 = scalar_select 0, %s10, %s8
  loop: start=0, step=1, limit=4
  $region2: #{categorical_net_forward.1} parent=0 // loop_pre_header
    _
  $region3: #{categorical_net_forward.1} parent=0 // loop_header
    %s13 = sphi 0, %s17
    %p14 = scmp.ge.s32.totalorder %s13, 4
    %s23 = sphi 0, %s25
    %s26 = sphi 0, %s23
    %s27 = sphi 0, %s26
    %s43 = sphi 0, %s27
    %s47 = sphi 0, %s47
    %s49 = sphi 0, %s47
    %s50 = sphi 0, %s49
    %s64 = sphi 0, %s50
    %s68 = sphi 0, %s68
    %s70 = sphi 0, %s68
    %s71 = sphi 0, %s70
    %s85 = sphi 0, %s71
    %s89 = sphi 0, %s89
    %s91 = sphi 0, %s89
    %s92 = sphi 0, %s91
    %s106 = sphi 0, %s92
    %s110 = sphi 0, %s110
    %s112 = sphi 0, %s110
    %s113 = sphi 0, %s112
    %s127 = sphi 0, %s113
    %s131 = sphi 0, %s131
    %s133 = sphi 0, %s131
    %s134 = sphi 0, %s133
    %s148 = sphi 0, %s134
    %s152 = sphi 0, %s152
    %s154 = sphi 0, %s152
    %s155 = sphi 0, %s154
    %s169 = sphi 0, %s155
    %s175 = sphi 0, %s177
    %s178 = sphi 0, %s175
    %s179 = sphi 0, %s178
    %s195 = sphi 0, %s179
  $region4: #{categorical_net_forward.1} parent=0 // loop_header_branch
    %16 = sbr.rel (%p14) target = $region8
  $region5: #{categorical_net_forward.1} parent=0 // loop_body
    %s18 = ssub.s32 %s13, 1
    %s19 = ssub.s32 %s13, 2
    %s20 = sadd.s32 %s13, 1
    %s21 = ssub.s32 %s13, %s20
    %p22 = scmp.eq.s32.totalorder %s21, 0
    %s24 = sadd.s32 %s23, 1
    %s25 = scalar_select %p22, %s23, %s24
    %p28 = pneg %p22
    %p29 = scmp.eq.s32.totalorder %s13, 1
    %p30 = por %p28, %p29
    %p31 = scmp.ne.s32.totalorder %s23, %s26
    %p32 = scmp.eq.s32.totalorder %s13, 0
    %p33 = por %p31, %p32
    %p34 = scmp.ne.s32.totalorder %s23, %s26
    %p35 = scmp.eq.s32.totalorder %s18, 1
    %p36 = por %p34, %p35
    %p37 = scmp.ne.s32.totalorder %s26, %s27
    %p38 = scmp.eq.s32.totalorder %s18, 0
    %p39 = por %p37, %p38
    %p40 = scmp.ne.s32.totalorder %s26, %s27
    %p41 = scmp.eq.s32.totalorder %s19, 1
    %p42 = por %p40, %p41
    %p44 = scmp.ne.s32.totalorder %s27, %s43
    %p45 = scmp.eq.s32.totalorder %s19, 0
    %p46 = por %p44, %p45
    %s48 = sadd.s32 %s47, 1
    %p51 = scmp.eq.s32.totalorder %s13, 1
    %p52 = scmp.ne.s32.totalorder %s47, %s49
    %p53 = scmp.eq.s32.totalorder %s13, 0
    %p54 = por %p52, %p53
    %p55 = scmp.ne.s32.totalorder %s47, %s49
    %p56 = scmp.eq.s32.totalorder %s18, 1
    %p57 = por %p55, %p56
    %p58 = scmp.ne.s32.totalorder %s49, %s50
    %p59 = scmp.eq.s32.totalorder %s18, 0
    %p60 = por %p58, %p59
    %p61 = scmp.ne.s32.totalorder %s49, %s50
    %p62 = scmp.eq.s32.totalorder %s19, 1
    %p63 = por %p61, %p62
    %p65 = scmp.ne.s32.totalorder %s50, %s64
    %p66 = scmp.eq.s32.totalorder %s19, 0
    %p67 = por %p65, %p66
    %s69 = sadd.s32 %s68, 1
    %p72 = scmp.eq.s32.totalorder %s13, 1
    %p73 = scmp.ne.s32.totalorder %s68, %s70
    %p74 = scmp.eq.s32.totalorder %s13, 0
    %p75 = por %p73, %p74
    %p76 = scmp.ne.s32.totalorder %s68, %s70
    %p77 = scmp.eq.s32.totalorder %s18, 1
    %p78 = por %p76, %p77
    %p79 = scmp.ne.s32.totalorder %s70, %s71
    %p80 = scmp.eq.s32.totalorder %s18, 0
    %p81 = por %p79, %p80
    %p82 = scmp.ne.s32.totalorder %s70, %s71
    %p83 = scmp.eq.s32.totalorder %s19, 1
    %p84 = por %p82, %p83
    %p86 = scmp.ne.s32.totalorder %s71, %s85
    %p87 = scmp.eq.s32.totalorder %s19, 0
    %p88 = por %p86, %p87
    %s90 = sadd.s32 %s89, 1
    %p93 = scmp.eq.s32.totalorder %s13, 1
    %p94 = scmp.ne.s32.totalorder %s89, %s91
    %p95 = scmp.eq.s32.totalorder %s13, 0
    %p96 = por %p94, %p95
    %p97 = scmp.ne.s32.totalorder %s89, %s91
    %p98 = scmp.eq.s32.totalorder %s18, 1
    %p99 = por %p97, %p98
    %p100 = scmp.ne.s32.totalorder %s91, %s92
    %p101 = scmp.eq.s32.totalorder %s18, 0
    %p102 = por %p100, %p101
    %p103 = scmp.ne.s32.totalorder %s91, %s92
    %p104 = scmp.eq.s32.totalorder %s19, 1
    %p105 = por %p103, %p104
    %p107 = scmp.ne.s32.totalorder %s92, %s106
    %p108 = scmp.eq.s32.totalorder %s19, 0
    %p109 = por %p107, %p108
    %s111 = sadd.s32 %s110, 1
    %p114 = scmp.eq.s32.totalorder %s13, 1
    %p115 = scmp.ne.s32.totalorder %s110, %s112
    %p116 = scmp.eq.s32.totalorder %s13, 0
    %p117 = por %p115, %p116
    %p118 = scmp.ne.s32.totalorder %s110, %s112
    %p119 = scmp.eq.s32.totalorder %s18, 1
    %p120 = por %p118, %p119
    %p121 = scmp.ne.s32.totalorder %s112, %s113
    %p122 = scmp.eq.s32.totalorder %s18, 0
    %p123 = por %p121, %p122
    %p124 = scmp.ne.s32.totalorder %s112, %s113
    %p125 = scmp.eq.s32.totalorder %s19, 1
    %p126 = por %p124, %p125
    %p128 = scmp.ne.s32.totalorder %s113, %s127
    %p129 = scmp.eq.s32.totalorder %s19, 0
    %p130 = por %p128, %p129
    %s132 = sadd.s32 %s131, 1
    %p135 = scmp.eq.s32.totalorder %s13, 1
    %p136 = scmp.ne.s32.totalorder %s131, %s133
    %p137 = scmp.eq.s32.totalorder %s13, 0
    %p138 = por %p136, %p137
    %p139 = scmp.ne.s32.totalorder %s131, %s133
    %p140 = scmp.eq.s32.totalorder %s18, 1
    %p141 = por %p139, %p140
    %p142 = scmp.ne.s32.totalorder %s133, %s134
    %p143 = scmp.eq.s32.totalorder %s18, 0
    %p144 = por %p142, %p143
    %p145 = scmp.ne.s32.totalorder %s133, %s134
    %p146 = scmp.eq.s32.totalorder %s19, 1
    %p147 = por %p145, %p146
    %p149 = scmp.ne.s32.totalorder %s134, %s148
    %p150 = scmp.eq.s32.totalorder %s19, 0
    %p151 = por %p149, %p150
    %s153 = sadd.s32 %s152, 1
    %p156 = scmp.eq.s32.totalorder %s13, 1
    %p157 = scmp.ne.s32.totalorder %s152, %s154
    %p158 = scmp.eq.s32.totalorder %s13, 0
    %p159 = por %p157, %p158
    %p160 = scmp.ne.s32.totalorder %s152, %s154
    %p161 = scmp.eq.s32.totalorder %s18, 1
    %p162 = por %p160, %p161
    %p163 = scmp.ne.s32.totalorder %s154, %s155
    %p164 = scmp.eq.s32.totalorder %s18, 0
    %p165 = por %p163, %p164
    %p166 = scmp.ne.s32.totalorder %s154, %s155
    %p167 = scmp.eq.s32.totalorder %s19, 1
    %p168 = por %p166, %p167
    %p170 = scmp.ne.s32.totalorder %s155, %s169
    %p171 = scmp.eq.s32.totalorder %s19, 0
    %p172 = por %p170, %p171
    %s173 = ssub.s32 %s13, %s20
    %p174 = scmp.eq.s32.totalorder %s173, 0
    %s176 = sadd.s32 %s175, 1
    %s177 = scalar_select %p174, %s175, %s176
    %p180 = pneg %p174
    %p181 = scmp.eq.s32.totalorder %s13, 1
    %p182 = por %p180, %p181
    %p183 = scmp.ne.s32.totalorder %s175, %s178
    %p184 = scmp.eq.s32.totalorder %s13, 0
    %p185 = por %p183, %p184
    %p186 = scmp.ne.s32.totalorder %s175, %s178
    %p187 = scmp.eq.s32.totalorder %s18, 1
    %p188 = por %p186, %p187
    %p189 = scmp.ne.s32.totalorder %s178, %s179
    %p190 = scmp.eq.s32.totalorder %s18, 0
    %p191 = por %p189, %p190
    %p192 = scmp.ne.s32.totalorder %s178, %s179
    %p193 = scmp.eq.s32.totalorder %s19, 1
    %p194 = por %p192, %p193
    %p196 = scmp.ne.s32.totalorder %s179, %s195
    %p197 = scmp.eq.s32.totalorder %s19, 0
    %p198 = por %p196, %p197
    %p199 = scmp.le.s32.totalorder 1, %s13
    %p200 = scmp.lt.s32.totalorder %s13, 3
    %p201 = pnand %p199, %p200
    %p202 = pneg %p201
    // Predicated region
    $region9: #{categorical_net_forward.1} parent=5 // pred_check
      _
    $region10: #{categorical_net_forward.1} parent=5 // pred_check_branch
      %204 = sbr.rel (%p201) target = $region12
    $region11: #{categorical_net_forward.1} parent=5 // pred_region
      %s205 = ssub.s32 %s13, 1
      // Predicated region
      $region13: #{categorical_net_forward.1} parent=11 // pred_check
        %p206 = pneg %p60
      $region14: #{categorical_net_forward.1} parent=11 // pred_check_branch
        %208 = sbr.rel (%p206) target = $region16
      $region15: #{categorical_net_forward.1} parent=11 // pred_region
        _
      $region16: #{categorical_net_forward.1} parent=11 // pred_fallthru
        _
      // Predicated region
      $region17: #{categorical_net_forward.1} parent=11 // pred_check
        %p209 = pneg %p81
      $region18: #{categorical_net_forward.1} parent=11 // pred_check_branch
        %211 = sbr.rel (%p209) target = $region20
      $region19: #{categorical_net_forward.1} parent=11 // pred_region
        _
      $region20: #{categorical_net_forward.1} parent=11 // pred_fallthru
        _
      // Predicated region
      $region21: #{categorical_net_forward.1} parent=11 // pred_check
        %p212 = pneg %p102
      $region22: #{categorical_net_forward.1} parent=11 // pred_check_branch
        %214 = sbr.rel (%p212) target = $region24
      $region23: #{categorical_net_forward.1} parent=11 // pred_region
        _
      $region24: #{categorical_net_forward.1} parent=11 // pred_fallthru
        _
      // Predicated region
      $region25: #{categorical_net_forward.1} parent=11 // pred_check
        %p215 = pneg %p123
      $region26: #{categorical_net_forward.1} parent=11 // pred_check_branch
        %217 = sbr.rel (%p215) target = $region28
      $region27: #{categorical_net_forward.1} parent=11 // pred_region
        _
      $region28: #{categorical_net_forward.1} parent=11 // pred_fallthru
        _
      // Predicated region
      $region29: #{categorical_net_forward.1} parent=11 // pred_check
        %p218 = pneg %p144
      $region30: #{categorical_net_forward.1} parent=11 // pred_check_branch
        %220 = sbr.rel (%p218) target = $region32
      $region31: #{categorical_net_forward.1} parent=11 // pred_region
        _
      $region32: #{categorical_net_forward.1} parent=11 // pred_fallthru
        _
      // Predicated region
      $region33: #{categorical_net_forward.1} parent=11 // pred_check
        %p221 = pneg %p165
      $region34: #{categorical_net_forward.1} parent=11 // pred_check_branch
        %223 = sbr.rel (%p221) target = $region36
      $region35: #{categorical_net_forward.1} parent=11 // pred_region
        _
      $region36: #{categorical_net_forward.1} parent=11 // pred_fallthru
        _
    $region12: #{categorical_net_forward.1} parent=5 // pred_fallthru
      _
    %p224 = scmp.lt.s32.totalorder %s13, 2
    // Predicated region
    $region37: #{categorical_net_forward.1} parent=5 // pred_check
      %p225 = pneg %p224
    $region38: #{categorical_net_forward.1} parent=5 // pred_check_branch
      %227 = sbr.rel (%p225) target = $region40
    $region39: #{categorical_net_forward.1} parent=5 // pred_region
      // Predicated region
      $region41: #{categorical_net_forward.1} parent=39 // pred_check
        %p228 = pneg %p33
      $region42: #{categorical_net_forward.1} parent=39 // pred_check_branch
        %230 = sbr.rel (%p228) target = $region44
      $region43: #{categorical_net_forward.1} parent=39 // pred_region
        %s231 = smul.u32 2, %s13
        %p232 = scmp.lt.s32.totalorder %s231, 3
        %s233 = scalar_select %p232, %s231, 3
        %s234 = smul.addr %s233, 8
        %s235 = scalar_lea.vmem %s0, %s234
        %s236 = smul.u32 2, %s13
      $region44: #{categorical_net_forward.1} parent=39 // pred_fallthru
        _
    $region40: #{categorical_net_forward.1} parent=5 // pred_fallthru
      _
    %p237 = scmp.le.s32.totalorder 1, %s13
    %p238 = scmp.lt.s32.totalorder %s13, 3
    %p239 = pnand %p237, %p238
    %p240 = pneg %p239
    // Predicated region
    $region45: #{categorical_net_forward.1} parent=5 // pred_check
      _
    $region46: #{categorical_net_forward.1} parent=5 // pred_check_branch
      %242 = sbr.rel (%p239) target = $region48
    $region47: #{categorical_net_forward.1} parent=5 // pred_region
      %s243 = ssub.s32 %s13, 1
      %s244 = smul.u32 2, %s18
      %p245 = scmp.lt.s32.totalorder %s244, 3
      %s246 = scalar_select %p245, %s244, 3
      %s247 = smul.addr %s246, 8
      %s248 = scalar_lea.vmem %s0, %s247
      %p249 = pneg %p39
      %p250 = pneg %p36
      %p251 = pneg %p60
      %p252 = pneg %p57
      %p253 = pneg %p81
      %p254 = pneg %p78
      %p255 = pneg %p102
      %p256 = pneg %p99
      %p257 = pneg %p123
      %p258 = pneg %p120
      %p259 = pneg %p144
      %p260 = pneg %p141
      %p261 = pneg %p165
      %p262 = pneg %p162
      %p263 = pneg %p191
      %p264 = pneg %p188
      %s265 = smul.u32 2, %s18
      %p266 = scmp.lt.s32.totalorder %s265, 3
      %s267 = scalar_select %p266, %s265, 3
      %s268 = smul.addr %s267, 8
      %s269 = scalar_lea.vmem %s7, %s268
      %s270 = smul.u32 2, %s18
      %p271 = scmp.lt.s32.totalorder %s270, 3
      %s272 = scalar_select %p271, %s270, 3
      %s273 = smul.addr %s272, 8
      %s274 = scalar_lea.vmem %s0, %s273
      %s275 = smul.u32 2, %s18
      %s276 = smul.u32 2, %s18
      %p277 = scmp.lt.s32.totalorder %s276, 3
      %s278 = scalar_select %p277, %s276, 3
      %s279 = smul.addr %s278, 8
      %s280 = scalar_lea.vmem %s7, %s279
      %s281 = smul.u32 2, %s18
      %v283 = vld [vmem:[%s274] sm:$0xff]
      %v284 = vld [vmem:[%s274 + $0x8] sm:$0xff]
      %v285 = vpack.c.bf16 %v284, %v283
      %v286 = vld [vmem:[%s1] sm:$0xff]
      %v287 = vld [vmem:[%s1 + $0x8] sm:$0xff]
      %v288 = vld [vmem:[%s1 + $0x10] sm:$0xff]
      %v289 = vld [vmem:[%s1 + $0x18] sm:$0xff]
      %v290 = vld [vmem:[%s1 + $0x20] sm:$0xff]
      %v291 = vld [vmem:[%s1 + $0x28] sm:$0xff]
      %v292 = vld [vmem:[%s1 + $0x30] sm:$0xff]
      %v293 = vld [vmem:[%s1 + $0x38] sm:$0xff]
      %v294 = vld [vmem:[%s2] sm:$0xf]
      %v296 = vperm.slane %v294, 0
      %v297 = vperm.slane %v294, 1
      %v298 = vperm.slane %v294, 2
      %v299 = vperm.slane %v294, 3
      %v312 = vunpack.c.l.b16 %v286
      %v313 = vunpack.c.h.b16 %v286
      %v314 = vunpack.c.l.b16 %v287
      %v315 = vunpack.c.h.b16 %v287
      %v316 = vunpack.c.l.b16 %v288
      %v317 = vunpack.c.h.b16 %v288
      %v318 = vunpack.c.l.b16 %v289
      %v319 = vunpack.c.h.b16 %v289
      %v320 = vunpack.c.l.b16 %v290
      %v321 = vunpack.c.h.b16 %v290
      %v322 = vunpack.c.l.b16 %v291
      %v323 = vunpack.c.h.b16 %v291
      %v324 = vunpack.c.l.b16 %v292
      %v325 = vunpack.c.h.b16 %v292
      %v326 = vunpack.c.l.b16 %v293
      %v327 = vunpack.c.h.b16 %v293
      %v328 = vpack.c.b16 %v316, %v312
      %v329 = vpack.c.b16 %v317, %v313
      %v330 = vpack.c.b16 %v318, %v314
      %v331 = vpack.c.b16 %v319, %v315
      %v332 = vpack.c.b16 %v324, %v320
      %v333 = vpack.c.b16 %v325, %v321
      %v334 = vpack.c.b16 %v326, %v322
      %v335 = vpack.c.b16 %v327, %v323
      %vm344 = vcmask 261120
      %v346 = vsel %vm344, %v285, 0
      %348 = vmatpush.bf16.msra.mxu0 0
      %349 = vmatpush.bf16.msra.mxu0 0
      %350 = vmatpush.bf16.msra.mxu0 0
      %351 = vmatpush.bf16.msra.mxu0 0
      %352 = vmatpush.bf16.msra.mxu0 0
      %353 = vmatpush.bf16.msra.mxu0 0
      %354 = vmatpush.bf16.msra.mxu0 %v332
      %355 = vmatpush.bf16.msra.mxu0 %v328
      %356 = vmatmul.bf16.gmra.mxu0 %v346
      %v357 = vpop.f32.mrf.mxu0
      %v358 = vadd.f32 %v296, %v357
      %v359 = vpop.f32.mrf.mxu0
      %v360 = vadd.f32 %v296, %v359
      %361 = vdwg.mxu0
      %362 = vmatpush.bf16.msra.mxu0 0
      %363 = vmatpush.bf16.msra.mxu0 0
      %364 = vmatpush.bf16.msra.mxu0 0
      %365 = vmatpush.bf16.msra.mxu0 0
      %366 = vmatpush.bf16.msra.mxu0 0
      %367 = vmatpush.bf16.msra.mxu0 0
      %368 = vmatpush.bf16.msra.mxu0 %v333
      %369 = vmatpush.bf16.msra.mxu0 %v329
      %370 = vmatmul.bf16.gmra.mxu0 %v346
      %v371 = vpop.f32.mrf.mxu0
      %v372 = vadd.f32 %v297, %v371
      %v373 = vpop.f32.mrf.mxu0
      %v374 = vadd.f32 %v297, %v373
      %375 = vdwg.mxu0
      %376 = vmatpush.bf16.msra.mxu0 0
      %377 = vmatpush.bf16.msra.mxu0 0
      %378 = vmatpush.bf16.msra.mxu0 0
      %379 = vmatpush.bf16.msra.mxu0 0
      %380 = vmatpush.bf16.msra.mxu0 0
      %381 = vmatpush.bf16.msra.mxu0 0
      %382 = vmatpush.bf16.msra.mxu0 %v334
      %383 = vmatpush.bf16.msra.mxu0 %v330
      %384 = vmatmul.bf16.gmra.mxu0 %v346
      %v385 = vpop.f32.mrf.mxu0
      %v386 = vadd.f32 %v298, %v385
      %v387 = vpop.f32.mrf.mxu0
      %v388 = vadd.f32 %v298, %v387
      %389 = vdwg.mxu0
      %390 = vmatpush.bf16.msra.mxu0 0
      %391 = vmatpush.bf16.msra.mxu0 0
      %392 = vmatpush.bf16.msra.mxu0 0
      %393 = vmatpush.bf16.msra.mxu0 0
      %394 = vmatpush.bf16.msra.mxu0 0
      %395 = vmatpush.bf16.msra.mxu0 0
      %396 = vmatpush.bf16.msra.mxu0 %v335
      %397 = vmatpush.bf16.msra.mxu0 %v331
      %398 = vmatmul.bf16.gmra.mxu0 %v346
      %v399 = vpop.f32.mrf.mxu0
      %v400 = vadd.f32 %v299, %v399
      %v401 = vpop.f32.mrf.mxu0
      %v402 = vadd.f32 %v299, %v401
      %403 = vdwg.mxu0
      %v404 = vmax.f32 %v358, 0.0
      %v405 = vmax.f32 %v372, 0.0
      %v406 = vmax.f32 %v386, 0.0
      %v407 = vmax.f32 %v400, 0.0
      %v408 = vmax.f32 %v360, 0.0
      %v409 = vmax.f32 %v374, 0.0
      %v410 = vmax.f32 %v388, 0.0
      %v411 = vmax.f32 %v402, 0.0
      %v412 = vpack.c.bf16 %v408, %v404
      %v413 = vpack.c.bf16 %v409, %v405
      %v414 = vpack.c.bf16 %v410, %v406
      %v415 = vpack.c.bf16 %v411, %v407
      %v416 = vld [vmem:[%s3] sm:$0xff]
      %v417 = vld [vmem:[%s3 + $0x8] sm:$0xff]
      %v418 = vld [vmem:[%s3 + $0x10] sm:$0xff]
      %v419 = vld [vmem:[%s3 + $0x18] sm:$0xff]
      %v420 = vld [vmem:[%s3 + $0x20] sm:$0xff]
      %v421 = vld [vmem:[%s3 + $0x28] sm:$0xff]
      %v422 = vld [vmem:[%s3 + $0x30] sm:$0xff]
      %v423 = vld [vmem:[%s3 + $0x38] sm:$0xff]
      %v424 = vld [vmem:[%s3 + $0x40] sm:$0xff]
      %v425 = vld [vmem:[%s3 + $0x48] sm:$0xff]
      %v426 = vld [vmem:[%s3 + $0x50] sm:$0xff]
      %v427 = vld [vmem:[%s3 + $0x58] sm:$0xff]
      %v428 = vld [vmem:[%s3 + $0x60] sm:$0xff]
      %v429 = vld [vmem:[%s3 + $0x68] sm:$0xff]
      %v430 = vld [vmem:[%s3 + $0x70] sm:$0xff]
      %v431 = vld [vmem:[%s3 + $0x78] sm:$0xff]
      %v432 = vld [vmem:[%s3 + $0x80] sm:$0xff]
      %v433 = vld [vmem:[%s3 + $0x88] sm:$0xff]
      %v434 = vld [vmem:[%s3 + $0x90] sm:$0xff]
      %v435 = vld [vmem:[%s3 + $0x98] sm:$0xff]
      %v436 = vld [vmem:[%s3 + $0xa0] sm:$0xff]
      %v437 = vld [vmem:[%s3 + $0xa8] sm:$0xff]
      %v438 = vld [vmem:[%s3 + $0xb0] sm:$0xff]
      %v439 = vld [vmem:[%s3 + $0xb8] sm:$0xff]
      %v440 = vld [vmem:[%s3 + $0xc0] sm:$0xff]
      %v441 = vld [vmem:[%s3 + $0xc8] sm:$0xff]
      %v442 = vld [vmem:[%s3 + $0xd0] sm:$0xff]
      %v443 = vld [vmem:[%s3 + $0xd8] sm:$0xff]
      %v444 = vld [vmem:[%s3 + $0xe0] sm:$0xff]
      %v445 = vld [vmem:[%s3 + $0xe8] sm:$0xff]
      %v446 = vld [vmem:[%s3 + $0xf0] sm:$0xff]
      %v447 = vld [vmem:[%s3 + $0xf8] sm:$0xff]
      %v448 = vld [vmem:[%s3 + $0x100] sm:$0xff]
      %v449 = vld [vmem:[%s3 + $0x108] sm:$0xff]
      %v450 = vld [vmem:[%s3 + $0x110] sm:$0xff]
      %v451 = vld [vmem:[%s3 + $0x118] sm:$0xff]
      %v452 = vld [vmem:[%s3 + $0x120] sm:$0xff]
      %v453 = vld [vmem:[%s3 + $0x128] sm:$0xff]
      %v454 = vld [vmem:[%s3 + $0x130] sm:$0xff]
      %v455 = vld [vmem:[%s3 + $0x138] sm:$0xff]
      %v456 = vld [vmem:[%s3 + $0x140] sm:$0xff]
      %v457 = vld [vmem:[%s3 + $0x148] sm:$0xff]
      %v458 = vld [vmem:[%s3 + $0x150] sm:$0xff]
      %v459 = vld [vmem:[%s3 + $0x158] sm:$0xff]
      %v460 = vld [vmem:[%s3 + $0x160] sm:$0xff]
      %v461 = vld [vmem:[%s3 + $0x168] sm:$0xff]
      %v462 = vld [vmem:[%s3 + $0x170] sm:$0xff]
      %v463 = vld [vmem:[%s3 + $0x178] sm:$0xff]
      %v464 = vld [vmem:[%s3 + $0x180] sm:$0xff]
      %v465 = vld [vmem:[%s3 + $0x188] sm:$0xff]
      %v466 = vld [vmem:[%s3 + $0x190] sm:$0xff]
      %v467 = vld [vmem:[%s3 + $0x198] sm:$0xff]
      %v468 = vld [vmem:[%s3 + $0x1a0] sm:$0xff]
      %v469 = vld [vmem:[%s3 + $0x1a8] sm:$0xff]
      %v470 = vld [vmem:[%s3 + $0x1b0] sm:$0xff]
      %v471 = vld [vmem:[%s3 + $0x1b8] sm:$0xff]
      %v472 = vld [vmem:[%s3 + $0x1c0] sm:$0xff]
      %v473 = vld [vmem:[%s3 + $0x1c8] sm:$0xff]
      %v474 = vld [vmem:[%s3 + $0x1d0] sm:$0xff]
      %v475 = vld [vmem:[%s3 + $0x1d8] sm:$0xff]
      %v476 = vld [vmem:[%s3 + $0x1e0] sm:$0xff]
      %v477 = vld [vmem:[%s3 + $0x1e8] sm:$0xff]
      %v478 = vld [vmem:[%s3 + $0x1f0] sm:$0xff]
      %v479 = vld [vmem:[%s3 + $0x1f8] sm:$0xff]
      %v480 = vld [vmem:[%s4] sm:$0x3]
      %v482 = vperm.slane %v480, 0
      %v483 = vperm.slane %v480, 1
      %v550 = vunpack.c.l.b16 %v416
      %v551 = vunpack.c.h.b16 %v416
      %v552 = vunpack.c.l.b16 %v417
      %v553 = vunpack.c.h.b16 %v417
      %v554 = vunpack.c.l.b16 %v418
      %v555 = vunpack.c.h.b16 %v418
      %v556 = vunpack.c.l.b16 %v419
      %v557 = vunpack.c.h.b16 %v419
      %v558 = vunpack.c.l.b16 %v420
      %v559 = vunpack.c.h.b16 %v420
      %v560 = vunpack.c.l.b16 %v421
      %v561 = vunpack.c.h.b16 %v421
      %v562 = vunpack.c.l.b16 %v422
      %v563 = vunpack.c.h.b16 %v422
      %v564 = vunpack.c.l.b16 %v423
      %v565 = vunpack.c.h.b16 %v423
      %v566 = vunpack.c.l.b16 %v424
      %v567 = vunpack.c.h.b16 %v424
      %v568 = vunpack.c.l.b16 %v425
      %v569 = vunpack.c.h.b16 %v425
      %v570 = vunpack.c.l.b16 %v426
      %v571 = vunpack.c.h.b16 %v426
      %v572 = vunpack.c.l.b16 %v427
      %v573 = vunpack.c.h.b16 %v427
      %v574 = vunpack.c.l.b16 %v428
      %v575 = vunpack.c.h.b16 %v428
      %v576 = vunpack.c.l.b16 %v429
      %v577 = vunpack.c.h.b16 %v429
      %v578 = vunpack.c.l.b16 %v430
      %v579 = vunpack.c.h.b16 %v430
      %v580 = vunpack.c.l.b16 %v431
      %v581 = vunpack.c.h.b16 %v431
      %v582 = vunpack.c.l.b16 %v432
      %v583 = vunpack.c.h.b16 %v432
      %v584 = vunpack.c.l.b16 %v433
      %v585 = vunpack.c.h.b16 %v433
      %v586 = vunpack.c.l.b16 %v434
      %v587 = vunpack.c.h.b16 %v434
      %v588 = vunpack.c.l.b16 %v435
      %v589 = vunpack.c.h.b16 %v435
      %v590 = vunpack.c.l.b16 %v436
      %v591 = vunpack.c.h.b16 %v436
      %v592 = vunpack.c.l.b16 %v437
      %v593 = vunpack.c.h.b16 %v437
      %v594 = vunpack.c.l.b16 %v438
      %v595 = vunpack.c.h.b16 %v438
      %v596 = vunpack.c.l.b16 %v439
      %v597 = vunpack.c.h.b16 %v439
      %v598 = vunpack.c.l.b16 %v440
      %v599 = vunpack.c.h.b16 %v440
      %v600 = vunpack.c.l.b16 %v441
      %v601 = vunpack.c.h.b16 %v441
      %v602 = vunpack.c.l.b16 %v442
      %v603 = vunpack.c.h.b16 %v442
      %v604 = vunpack.c.l.b16 %v443
      %v605 = vunpack.c.h.b16 %v443
      %v606 = vunpack.c.l.b16 %v444
      %v607 = vunpack.c.h.b16 %v444
      %v608 = vunpack.c.l.b16 %v445
      %v609 = vunpack.c.h.b16 %v445
      %v610 = vunpack.c.l.b16 %v446
      %v611 = vunpack.c.h.b16 %v446
      %v612 = vunpack.c.l.b16 %v447
      %v613 = vunpack.c.h.b16 %v447
      %v614 = vunpack.c.l.b16 %v448
      %v615 = vunpack.c.h.b16 %v448
      %v616 = vunpack.c.l.b16 %v449
      %v617 = vunpack.c.h.b16 %v449
      %v618 = vunpack.c.l.b16 %v450
      %v619 = vunpack.c.h.b16 %v450
      %v620 = vunpack.c.l.b16 %v451
      %v621 = vunpack.c.h.b16 %v451
      %v622 = vunpack.c.l.b16 %v452
      %v623 = vunpack.c.h.b16 %v452
      %v624 = vunpack.c.l.b16 %v453
      %v625 = vunpack.c.h.b16 %v453
      %v626 = vunpack.c.l.b16 %v454
      %v627 = vunpack.c.h.b16 %v454
      %v628 = vunpack.c.l.b16 %v455
      %v629 = vunpack.c.h.b16 %v455
      %v630 = vunpack.c.l.b16 %v456
      %v631 = vunpack.c.h.b16 %v456
      %v632 = vunpack.c.l.b16 %v457
      %v633 = vunpack.c.h.b16 %v457
      %v634 = vunpack.c.l.b16 %v458
      %v635 = vunpack.c.h.b16 %v458
      %v636 = vunpack.c.l.b16 %v459
      %v637 = vunpack.c.h.b16 %v459
      %v638 = vunpack.c.l.b16 %v460
      %v639 = vunpack.c.h.b16 %v460
      %v640 = vunpack.c.l.b16 %v461
      %v641 = vunpack.c.h.b16 %v461
      %v642 = vunpack.c.l.b16 %v462
      %v643 = vunpack.c.h.b16 %v462
      %v644 = vunpack.c.l.b16 %v463
      %v645 = vunpack.c.h.b16 %v463
      %v646 = vunpack.c.l.b16 %v464
      %v647 = vunpack.c.h.b16 %v464
      %v648 = vunpack.c.l.b16 %v465
      %v649 = vunpack.c.h.b16 %v465
      %v650 = vunpack.c.l.b16 %v466
      %v651 = vunpack.c.h.b16 %v466
      %v652 = vunpack.c.l.b16 %v467
      %v653 = vunpack.c.h.b16 %v467
      %v654 = vunpack.c.l.b16 %v468
      %v655 = vunpack.c.h.b16 %v468
      %v656 = vunpack.c.l.b16 %v469
      %v657 = vunpack.c.h.b16 %v469
      %v658 = vunpack.c.l.b16 %v470
      %v659 = vunpack.c.h.b16 %v470
      %v660 = vunpack.c.l.b16 %v471
      %v661 = vunpack.c.h.b16 %v471
      %v662 = vunpack.c.l.b16 %v472
      %v663 = vunpack.c.h.b16 %v472
      %v664 = vunpack.c.l.b16 %v473
      %v665 = vunpack.c.h.b16 %v473
      %v666 = vunpack.c.l.b16 %v474
      %v667 = vunpack.c.h.b16 %v474
      %v668 = vunpack.c.l.b16 %v475
      %v669 = vunpack.c.h.b16 %v475
      %v670 = vunpack.c.l.b16 %v476
      %v671 = vunpack.c.h.b16 %v476
      %v672 = vunpack.c.l.b16 %v477
      %v673 = vunpack.c.h.b16 %v477
      %v674 = vunpack.c.l.b16 %v478
      %v675 = vunpack.c.h.b16 %v478
      %v676 = vunpack.c.l.b16 %v479
      %v677 = vunpack.c.h.b16 %v479
      %v678 = vpack.c.b16 %v552, %v550
      %v679 = vpack.c.b16 %v553, %v551
      %v680 = vpack.c.b16 %v556, %v554
      %v681 = vpack.c.b16 %v557, %v555
      %v682 = vpack.c.b16 %v560, %v558
      %v683 = vpack.c.b16 %v561, %v559
      %v684 = vpack.c.b16 %v564, %v562
      %v685 = vpack.c.b16 %v565, %v563
      %v686 = vpack.c.b16 %v568, %v566
      %v687 = vpack.c.b16 %v569, %v567
      %v688 = vpack.c.b16 %v572, %v570
      %v689 = vpack.c.b16 %v573, %v571
      %v690 = vpack.c.b16 %v576, %v574
      %v691 = vpack.c.b16 %v577, %v575
      %v692 = vpack.c.b16 %v580, %v578
      %v693 = vpack.c.b16 %v581, %v579
      %v694 = vpack.c.b16 %v584, %v582
      %v695 = vpack.c.b16 %v585, %v583
      %v696 = vpack.c.b16 %v588, %v586
      %v697 = vpack.c.b16 %v589, %v587
      %v698 = vpack.c.b16 %v592, %v590
      %v699 = vpack.c.b16 %v593, %v591
      %v700 = vpack.c.b16 %v596, %v594
      %v701 = vpack.c.b16 %v597, %v595
      %v702 = vpack.c.b16 %v600, %v598
      %v703 = vpack.c.b16 %v601, %v599
      %v704 = vpack.c.b16 %v604, %v602
      %v705 = vpack.c.b16 %v605, %v603
      %v706 = vpack.c.b16 %v608, %v606
      %v707 = vpack.c.b16 %v609, %v607
      %v708 = vpack.c.b16 %v612, %v610
      %v709 = vpack.c.b16 %v613, %v611
      %v710 = vpack.c.b16 %v616, %v614
      %v711 = vpack.c.b16 %v617, %v615
      %v712 = vpack.c.b16 %v620, %v618
      %v713 = vpack.c.b16 %v621, %v619
      %v714 = vpack.c.b16 %v624, %v622
      %v715 = vpack.c.b16 %v625, %v623
      %v716 = vpack.c.b16 %v628, %v626
      %v717 = vpack.c.b16 %v629, %v627
      %v718 = vpack.c.b16 %v632, %v630
      %v719 = vpack.c.b16 %v633, %v631
      %v720 = vpack.c.b16 %v636, %v634
      %v721 = vpack.c.b16 %v637, %v635
      %v722 = vpack.c.b16 %v640, %v638
      %v723 = vpack.c.b16 %v641, %v639
      %v724 = vpack.c.b16 %v644, %v642
      %v725 = vpack.c.b16 %v645, %v643
      %v726 = vpack.c.b16 %v648, %v646
      %v727 = vpack.c.b16 %v649, %v647
      %v728 = vpack.c.b16 %v652, %v650
      %v729 = vpack.c.b16 %v653, %v651
      %v730 = vpack.c.b16 %v656, %v654
      %v731 = vpack.c.b16 %v657, %v655
      %v732 = vpack.c.b16 %v660, %v658
      %v733 = vpack.c.b16 %v661, %v659
      %v734 = vpack.c.b16 %v664, %v662
      %v735 = vpack.c.b16 %v665, %v663
      %v736 = vpack.c.b16 %v668, %v666
      %v737 = vpack.c.b16 %v669, %v667
      %v738 = vpack.c.b16 %v672, %v670
      %v739 = vpack.c.b16 %v673, %v671
      %v740 = vpack.c.b16 %v676, %v674
      %v741 = vpack.c.b16 %v677, %v675
      %806 = vmatpush.bf16.msra.mxu0 %v692
      %807 = vmatpush.bf16.msra.mxu0 %v690
      %808 = vmatpush.bf16.msra.mxu0 %v688
      %809 = vmatpush.bf16.msra.mxu0 %v686
      %810 = vmatpush.bf16.msra.mxu0 %v684
      %811 = vmatpush.bf16.msra.mxu0 %v682
      %812 = vmatpush.bf16.msra.mxu0 %v680
      %813 = vmatpush.bf16.msra.mxu0 %v678
      %814 = vmatmul.bf16.gmra.mxu0 %v412
      %v815 = vpop.f32.mrf.mxu0
      %v816 = vadd.f32 %v482, %v815
      %v817 = vpop.f32.mrf.mxu0
      %v818 = vadd.f32 %v482, %v817
      %819 = vdwg.mxu0
      %820 = vmatpush.bf16.msra.mxu0 %v708
      %821 = vmatpush.bf16.msra.mxu0 %v706
      %822 = vmatpush.bf16.msra.mxu0 %v704
      %823 = vmatpush.bf16.msra.mxu0 %v702
      %824 = vmatpush.bf16.msra.mxu0 %v700
      %825 = vmatpush.bf16.msra.mxu0 %v698
      %826 = vmatpush.bf16.msra.mxu0 %v696
      %827 = vmatpush.bf16.msra.mxu0 %v694
      %828 = vmatmul.bf16.gmra.mxu0 %v413
      %v829 = vpop.f32.mrf.mxu0
      %v830 = vadd.f32 %v816, %v829
      %v831 = vpop.f32.mrf.mxu0
      %v832 = vadd.f32 %v818, %v831
      %833 = vdwg.mxu0
      %834 = vmatpush.bf16.msra.mxu0 %v724
      %835 = vmatpush.bf16.msra.mxu0 %v722
      %836 = vmatpush.bf16.msra.mxu0 %v720
      %837 = vmatpush.bf16.msra.mxu0 %v718
      %838 = vmatpush.bf16.msra.mxu0 %v716
      %839 = vmatpush.bf16.msra.mxu0 %v714
      %840 = vmatpush.bf16.msra.mxu0 %v712
      %841 = vmatpush.bf16.msra.mxu0 %v710
      %842 = vmatmul.bf16.gmra.mxu0 %v414
      %v843 = vpop.f32.mrf.mxu0
      %v844 = vadd.f32 %v830, %v843
      %v845 = vpop.f32.mrf.mxu0
      %v846 = vadd.f32 %v832, %v845
      %847 = vdwg.mxu0
      %848 = vmatpush.bf16.msra.mxu0 %v740
      %849 = vmatpush.bf16.msra.mxu0 %v738
      %850 = vmatpush.bf16.msra.mxu0 %v736
      %851 = vmatpush.bf16.msra.mxu0 %v734
      %852 = vmatpush.bf16.msra.mxu0 %v732
      %853 = vmatpush.bf16.msra.mxu0 %v730
      %854 = vmatpush.bf16.msra.mxu0 %v728
      %855 = vmatpush.bf16.msra.mxu0 %v726
      %856 = vmatmul.bf16.gmra.mxu0 %v415
      %v857 = vpop.f32.mrf.mxu0
      %v858 = vadd.f32 %v844, %v857
      %v859 = vpop.f32.mrf.mxu0
      %v860 = vadd.f32 %v846, %v859
      %861 = vdwg.mxu0
      %862 = vmatpush.bf16.msra.mxu0 %v693
      %863 = vmatpush.bf16.msra.mxu0 %v691
      %864 = vmatpush.bf16.msra.mxu0 %v689
      %865 = vmatpush.bf16.msra.mxu0 %v687
      %866 = vmatpush.bf16.msra.mxu0 %v685
      %867 = vmatpush.bf16.msra.mxu0 %v683
      %868 = vmatpush.bf16.msra.mxu0 %v681
      %869 = vmatpush.bf16.msra.mxu0 %v679
      %870 = vmatmul.bf16.gmra.mxu0 %v412
      %v871 = vpop.f32.mrf.mxu0
      %v872 = vadd.f32 %v483, %v871
      %v873 = vpop.f32.mrf.mxu0
      %v874 = vadd.f32 %v483, %v873
      %875 = vdwg.mxu0
      %876 = vmatpush.bf16.msra.mxu0 %v709
      %877 = vmatpush.bf16.msra.mxu0 %v707
      %878 = vmatpush.bf16.msra.mxu0 %v705
      %879 = vmatpush.bf16.msra.mxu0 %v703
      %880 = vmatpush.bf16.msra.mxu0 %v701
      %881 = vmatpush.bf16.msra.mxu0 %v699
      %882 = vmatpush.bf16.msra.mxu0 %v697
      %883 = vmatpush.bf16.msra.mxu0 %v695
      %884 = vmatmul.bf16.gmra.mxu0 %v413
      %v885 = vpop.f32.mrf.mxu0
      %v886 = vadd.f32 %v872, %v885
      %v887 = vpop.f32.mrf.mxu0
      %v888 = vadd.f32 %v874, %v887
      %889 = vdwg.mxu0
      %890 = vmatpush.bf16.msra.mxu0 %v725
      %891 = vmatpush.bf16.msra.mxu0 %v723
      %892 = vmatpush.bf16.msra.mxu0 %v721
      %893 = vmatpush.bf16.msra.mxu0 %v719
      %894 = vmatpush.bf16.msra.mxu0 %v717
      %895 = vmatpush.bf16.msra.mxu0 %v715
      %896 = vmatpush.bf16.msra.mxu0 %v713
      %897 = vmatpush.bf16.msra.mxu0 %v711
      %898 = vmatmul.bf16.gmra.mxu0 %v414
      %v899 = vpop.f32.mrf.mxu0
      %v900 = vadd.f32 %v886, %v899
      %v901 = vpop.f32.mrf.mxu0
      %v902 = vadd.f32 %v888, %v901
      %903 = vdwg.mxu0
      %904 = vmatpush.bf16.msra.mxu0 %v741
      %905 = vmatpush.bf16.msra.mxu0 %v739
      %906 = vmatpush.bf16.msra.mxu0 %v737
      %907 = vmatpush.bf16.msra.mxu0 %v735
      %908 = vmatpush.bf16.msra.mxu0 %v733
      %909 = vmatpush.bf16.msra.mxu0 %v731
      %910 = vmatpush.bf16.msra.mxu0 %v729
      %911 = vmatpush.bf16.msra.mxu0 %v727
      %912 = vmatmul.bf16.gmra.mxu0 %v415
      %v913 = vpop.f32.mrf.mxu0
      %v914 = vadd.f32 %v900, %v913
      %v915 = vpop.f32.mrf.mxu0
      %v916 = vadd.f32 %v902, %v915
      %917 = vdwg.mxu0
      %v918 = vmax.f32 %v858, 0.0
      %v919 = vmax.f32 %v914, 0.0
      %v920 = vmax.f32 %v860, 0.0
      %v921 = vmax.f32 %v916, 0.0
      %v922 = vpack.c.bf16 %v920, %v918
      %v923 = vpack.c.bf16 %v921, %v919
      %v924 = vld [vmem:[%s5] sm:$0xf]
      %v925 = vld [vmem:[%s5 + $0x4] sm:$0xf]
      %v926 = vld [vmem:[%s5 + $0x8] sm:$0xf]
      %v927 = vld [vmem:[%s5 + $0xc] sm:$0xf]
      %v928 = vld [vmem:[%s5 + $0x10] sm:$0xf]
      %v929 = vld [vmem:[%s5 + $0x14] sm:$0xf]
      %v930 = vld [vmem:[%s5 + $0x18] sm:$0xf]
      %v931 = vld [vmem:[%s5 + $0x1c] sm:$0xf]
      %v932 = vld [vmem:[%s5 + $0x20] sm:$0xf]
      %v933 = vld [vmem:[%s5 + $0x24] sm:$0xf]
      %v934 = vld [vmem:[%s5 + $0x28] sm:$0xf]
      %v935 = vld [vmem:[%s5 + $0x2c] sm:$0xf]
      %v936 = vld [vmem:[%s5 + $0x30] sm:$0xf]
      %v937 = vld [vmem:[%s5 + $0x34] sm:$0xf]
      %v938 = vld [vmem:[%s5 + $0x38] sm:$0xf]
      %v939 = vld [vmem:[%s5 + $0x3c] sm:$0xf]
      %v940 = vld [vmem:[%s5 + $0x40] sm:$0xf]
      %v941 = vld [vmem:[%s5 + $0x44] sm:$0xf]
      %v942 = vld [vmem:[%s5 + $0x48] sm:$0xf]
      %v943 = vld [vmem:[%s5 + $0x4c] sm:$0xf]
      %v944 = vld [vmem:[%s5 + $0x50] sm:$0xf]
      %v945 = vld [vmem:[%s5 + $0x54] sm:$0xf]
      %v946 = vld [vmem:[%s5 + $0x58] sm:$0xf]
      %v947 = vld [vmem:[%s5 + $0x5c] sm:$0xf]
      %v948 = vld [vmem:[%s5 + $0x60] sm:$0xf]
      %v949 = vld [vmem:[%s5 + $0x64] sm:$0xf]
      %v950 = vld [vmem:[%s5 + $0x68] sm:$0xf]
      %v951 = vld [vmem:[%s5 + $0x6c] sm:$0xf]
      %v952 = vld [vmem:[%s5 + $0x70] sm:$0xf]
      %v953 = vld [vmem:[%s5 + $0x74] sm:$0xf]
      %v954 = vld [vmem:[%s5 + $0x78] sm:$0xf]
      %v955 = vld [vmem:[%s5 + $0x7c] sm:$0xf]
      %v956 = vld [vmem:[%s6] sm:$0x1]
      %v958 = vperm.slane %v956, 0
      %v992 = vunpack.c.l.b16 %v924
      %v993 = vunpack.c.l.b16 %v925
      %v994 = vunpack.c.l.b16 %v926
      %v995 = vunpack.c.l.b16 %v927
      %v996 = vunpack.c.l.b16 %v928
      %v997 = vunpack.c.l.b16 %v929
      %v998 = vunpack.c.l.b16 %v930
      %v999 = vunpack.c.l.b16 %v931
      %v1000 = vunpack.c.l.b16 %v932
      %v1001 = vunpack.c.l.b16 %v933
      %v1002 = vunpack.c.l.b16 %v934
      %v1003 = vunpack.c.l.b16 %v935
      %v1004 = vunpack.c.l.b16 %v936
      %v1005 = vunpack.c.l.b16 %v937
      %v1006 = vunpack.c.l.b16 %v938
      %v1007 = vunpack.c.l.b16 %v939
      %v1008 = vunpack.c.l.b16 %v940
      %v1009 = vunpack.c.l.b16 %v941
      %v1010 = vunpack.c.l.b16 %v942
      %v1011 = vunpack.c.l.b16 %v943
      %v1012 = vunpack.c.l.b16 %v944
      %v1013 = vunpack.c.l.b16 %v945
      %v1014 = vunpack.c.l.b16 %v946
      %v1015 = vunpack.c.l.b16 %v947
      %v1016 = vunpack.c.l.b16 %v948
      %v1017 = vunpack.c.l.b16 %v949
      %v1018 = vunpack.c.l.b16 %v950
      %v1019 = vunpack.c.l.b16 %v951
      %v1020 = vunpack.c.l.b16 %v952
      %v1021 = vunpack.c.l.b16 %v953
      %v1022 = vunpack.c.l.b16 %v954
      %v1023 = vunpack.c.l.b16 %v955
      %v1024 = vpack.c.b16 %v993, %v992
      %v1025 = vpack.c.b16 %v995, %v994
      %v1026 = vpack.c.b16 %v997, %v996
      %v1027 = vpack.c.b16 %v999, %v998
      %v1028 = vpack.c.b16 %v1001, %v1000
      %v1029 = vpack.c.b16 %v1003, %v1002
      %v1030 = vpack.c.b16 %v1005, %v1004
      %v1031 = vpack.c.b16 %v1007, %v1006
      %v1032 = vpack.c.b16 %v1009, %v1008
      %v1033 = vpack.c.b16 %v1011, %v1010
      %v1034 = vpack.c.b16 %v1013, %v1012
      %v1035 = vpack.c.b16 %v1015, %v1014
      %v1036 = vpack.c.b16 %v1017, %v1016
      %v1037 = vpack.c.b16 %v1019, %v1018
      %v1038 = vpack.c.b16 %v1021, %v1020
      %v1039 = vpack.c.b16 %v1023, %v1022
      %1056 = vmatpush.bf16.msra.mxu0 %v1031
      %1057 = vmatpush.bf16.msra.mxu0 %v1030
      %1058 = vmatpush.bf16.msra.mxu0 %v1029
      %1059 = vmatpush.bf16.msra.mxu0 %v1028
      %1060 = vmatpush.bf16.msra.mxu0 %v1027
      %1061 = vmatpush.bf16.msra.mxu0 %v1026
      %1062 = vmatpush.bf16.msra.mxu0 %v1025
      %1063 = vmatpush.bf16.msra.mxu0 %v1024
      %1064 = vmatmul.bf16.gmra.mxu0 %v922
      %v1065 = vpop.f32.mrf.mxu0
      %v1066 = vadd.f32 %v958, %v1065
      %v1067 = vpop.f32.mrf.mxu0
      %v1068 = vadd.f32 %v958, %v1067
      %1069 = vdwg.mxu0
      %1070 = vmatpush.bf16.msra.mxu0 %v1039
      %1071 = vmatpush.bf16.msra.mxu0 %v1038
      %1072 = vmatpush.bf16.msra.mxu0 %v1037
      %1073 = vmatpush.bf16.msra.mxu0 %v1036
      %1074 = vmatpush.bf16.msra.mxu0 %v1035
      %1075 = vmatpush.bf16.msra.mxu0 %v1034
      %1076 = vmatpush.bf16.msra.mxu0 %v1033
      %1077 = vmatpush.bf16.msra.mxu0 %v1032
      %1078 = vmatmul.bf16.gmra.mxu0 %v923
      %v1079 = vpop.f32.mrf.mxu0
      %v1080 = vadd.f32 %v1066, %v1079
      %v1081 = vpop.f32.mrf.mxu0
      %v1082 = vadd.f32 %v1068, %v1081
      %1083 = vdwg.mxu0
      %1084 = vst [vmem:[%s280] sm:$0xff] %v1080
      %1085 = vst [vmem:[%s280 + $0x8] sm:$0xff] %v1082
      %s1086 = smul.u32 2, %s18
      %p1087 = scmp.lt.s32.totalorder %s1086, 3
      %s1088 = scalar_select %p1087, %s1086, 3
      %s1089 = smul.addr %s1088, 8
      %s1090 = scalar_lea.vmem %s7, %s1089
      // Predicated region
      $region49: #{categorical_net_forward.1} parent=47 // pred_check
        %p1091 = pneg %p188
      $region50: #{categorical_net_forward.1} parent=47 // pred_check_branch
        %1093 = sbr.rel (%p1091) target = $region52
      $region51: #{categorical_net_forward.1} parent=47 // pred_region
        %s1094 = smul.u32 2, %s18
      $region52: #{categorical_net_forward.1} parent=47 // pred_fallthru
        _
    $region48: #{categorical_net_forward.1} parent=5 // pred_fallthru
      _
    %p1095 = scmp.le.s32.totalorder 2, %s13
    // Predicated region
    $region53: #{categorical_net_forward.1} parent=5 // pred_check
      %p1096 = pneg %p1095
    $region54: #{categorical_net_forward.1} parent=5 // pred_check_branch
      %1098 = sbr.rel (%p1096) target = $region56
    $region55: #{categorical_net_forward.1} parent=5 // pred_region
      %s1099 = ssub.s32 %s13, 2
      // Predicated region
      $region57: #{categorical_net_forward.1} parent=55 // pred_check
        %p1100 = pneg %p194
      $region58: #{categorical_net_forward.1} parent=55 // pred_check_branch
        %1102 = sbr.rel (%p1100) target = $region60
      $region59: #{categorical_net_forward.1} parent=55 // pred_region
        %s1103 = smul.u32 2, %s19
        %p1104 = scmp.lt.s32.totalorder %s1103, 3
        %s1105 = scalar_select %p1104, %s1103, 3
        %s1106 = smul.addr %s1105, 8
        %s1107 = scalar_lea.vmem %s7, %s1106
      $region60: #{categorical_net_forward.1} parent=55 // pred_fallthru
        _
    $region56: #{categorical_net_forward.1} parent=5 // pred_fallthru
      _
  $region6: #{categorical_net_forward.1} parent=0 // loop_footer
    %s17 = sadd.s32 1, %s13
  $region7: #{categorical_net_forward.1} parent=0 // loop_footer_branch
    %12 = sbr.rel target = $region3
  $region8: #{categorical_net_forward.1} parent=0 // loop_exit
    _

</llo_original>
